<compile_context>
chip_gen: v6e
topology: v6e:2x2x1
jax: 0.10.0
libtpu: 0.0.40
codegen_flags: <defaults>
</compile_context>

<pallas_src>
import functools

import jax
import jax.numpy as jnp
from jax import lax
from jax.experimental import pallas as pl
from jax.experimental.pallas import tpu as pltpu


UNPOOL_FACTOR = 4  # Healpix nearest-neighbour unpooling factor


def _full_spec(shape):
    rank = len(shape)
    return pl.BlockSpec(tuple(shape), lambda *_: (0,) * rank)


# ----------------------------------------------------------------------------
# Fused kernel:
#   stage 1: (already-unpooled) ChebConv -> BatchNorm1d -> ReLU
#   stage 2: implicit channel-concat ChebConv -> BatchNorm1d -> ReLU
# ----------------------------------------------------------------------------
def _fused_kernel(xu_ref, cc_ref, lt2_ref, w1_ref, w2y_ref, w2c_ref,
                  g1_ref, b1_ref, g2_ref, b2_ref, o_ref, *, B, Cout, K, eps):
    f32, bf16 = jnp.float32, jnp.bfloat16
    lt2 = lt2_ref[...]                      # (V, V) bf16 == 2 * L^T, shared by both stages
    V = lt2.shape[1]
    M = B * Cout

    def cheb_accumulate(x, w_ref, acc):
        """acc += sum_k blockdiag(W_k) @ T_k(L) x, accumulated per order.

        x: (rows, V) b-major source rows; w_ref: (K, M, rows) bf16.
        Only T_{k-1}, T_{k-2} and acc stay live (f32 carry, bf16 MXU operands).
        """
        t0_b = x.astype(bf16)
        acc = acc + jnp.dot(w_ref[0], t0_b, preferred_element_type=f32)
        if K == 1:
            return acc
        t_prev2 = x.astype(f32)                                   # T_0 (f32 carry)
        # T_1 = L T_0 = 0.5 * (T_0 @ (2 L^T))   -- the 2x lives in lt2 (exact)
        t_prev = 0.5 * jnp.dot(t0_b, lt2, preferred_element_type=f32)
        acc = acc + jnp.dot(w_ref[1], t_prev.astype(bf16),
                            preferred_element_type=f32)
        for k in range(2, K):
            # T_k = 2 L T_{k-1} - T_{k-2} = bf16(T_{k-1}) @ lt2 - T_{k-2}
            t_new = jnp.dot(t_prev.astype(bf16), lt2,
                            preferred_element_type=f32) - t_prev2
            acc = acc + jnp.dot(w_ref[k], t_new.astype(bf16),
                                preferred_element_type=f32)
            t_prev2, t_prev = t_prev, t_new
        return acc

    def bn_relu(acc, g_ref, b_ref):
        """Training-mode BatchNorm1d (biased stats over (B, V)) + ReLU.

        Stats come straight from the in-register accumulator -- no output
        read-modify-write.  acc rows are b*Cout + o, so the (B, Cout, V) view
        is layout-trivial (Cout is a multiple of 8).
        """
        y = acc.reshape(B, Cout, V)
        n = B * V
        mean = jnp.sum(jnp.sum(y, axis=2, keepdims=True),
                       axis=0, keepdims=True) / n                 # (1, Cout, 1)
        d = y - mean
        var = jnp.sum(jnp.sum(d * d, axis=2, keepdims=True),
                      axis=0, keepdims=True) / n                  # biased, like torch BN
        scale = g_ref[...][None] * lax.rsqrt(var + eps)           # (1, Cout, 1)
        out = jnp.maximum(d * scale + b_ref[...][None], 0.0)
        return out.reshape(M, V)

    # --- stage 1: unpooled ChebConv -> BN -> ReLU ----------------------------
    acc1 = cheb_accumulate(xu_ref[...], w1_ref, jnp.zeros((M, V), f32))
    y1 = bn_relu(acc1, g1_ref, b1_ref)                            # (B*Cout, V) f32, VMEM only

    # --- stage 2: concat is implicit; each source recursed independently -----
    acc2 = cheb_accumulate(y1, w2y_ref, jnp.zeros((M, V), f32))   # pool-output channels
    acc2 = cheb_accumulate(cc_ref[...], w2c_ref, acc2)            # encoder-skip channels
    o_ref[...] = bn_relu(acc2, g2_ref, b2_ref)


# ----------------------------------------------------------------------------
# Module forward wrapper
# ----------------------------------------------------------------------------
def spherical_cheb_bn_pool_concat(x, concat_data, lap, params,
                                  *, unpool_factor=UNPOOL_FACTOR, eps=1e-5):
    """x: [B, Vin, Cin], concat_data: [B, 4*Vin, Cc] -> [B, 4*Vin, Cout]."""
    B, Vin, Cin = x.shape
    _, Vu, Cc = concat_data.shape
    K, _, Cout = params["w1"].shape
    assert Vu == Vin * unpool_factor
    # Keeps the (B*Cout, V) <-> (B, Cout, V) in-kernel views tile-aligned.
    assert Cout % 8 == 0, "pad out_channels to a multiple of 8"

    bf16, f32 = jnp.bfloat16, jnp.float32

    # b-major rows (row = b*C + c), V lane-dense.
    x_rows = x.transpose(0, 2, 1).reshape(B * Cin, Vin)
    # Healpix nearest-neighbour unpool = lane repeat (parent i -> children 4i..4i+3).
    # Replaces the v2 dense replication-matrix matmul (rt is gone).
    xu = jnp.repeat(x_rows, unpool_factor, axis=1).astype(bf16)        # (B*Cin, Vu)
    cc = concat_data.transpose(0, 2, 1).reshape(B * Cc, Vu).astype(bf16)

    # Single Laplacian operand, shared by both stages; Chebyshev 2x folded in
    # (doubling in bf16 is exact).
    lt2 = (2.0 * lap.T).astype(bf16)                                    # (Vu, Vu)

    # Per-order weights, block-diagonal over the batch so every contraction is
    # one dense 2-D MXU dot on the b-major rows (no per-batch sublane slices).
    # TODO(synk): for large B replace the block-diagonal form (O(B) weight
    # FLOPs/VMEM overhead) with an aligned per-batch loop or batched dot_general.
    eyeB = jnp.eye(B, dtype=f32)

    def blockdiag(w_koc):                                               # (K,Cout,C) -> (K,B*Cout,B*C)
        k, o, c = w_koc.shape
        return jnp.einsum('ab,koc->kaobc', eyeB, w_koc).reshape(k, B * o, B * c)

    w1t = params["w1"].transpose(0, 2, 1)                               # (K, Cout, Cin)
    w2t = params["w2"].transpose(0, 2, 1)                               # (K, Cout, Cout+Cc)
    w1b = blockdiag(w1t).astype(bf16)                                   # (K, B*Cout, B*Cin)
    w2yb = blockdiag(w2t[:, :, :Cout]).astype(bf16)                     # pool-output channels
    w2cb = blockdiag(w2t[:, :, Cout:]).astype(bf16)                     # encoder-skip channels

    g1 = params["g1"].reshape(Cout, 1).astype(f32)
    b1 = params["b1"].reshape(Cout, 1).astype(f32)
    g2 = params["g2"].reshape(Cout, 1).astype(f32)
    b2 = params["b2"].reshape(Cout, 1).astype(f32)

    operands = [xu, cc, lt2, w1b, w2yb, w2cb, g1, b1, g2, b2]

    # Cost estimate: the Laplacian recursion dominates.
    rows = (B * Cin) + (B * Cout) + (B * Cc)
    flops = 2 * max(K - 1, 0) * rows * Vu * Vu                          # recursion matmuls
    flops += 2 * K * (B * Cout) * (B * (Cin + Cout + Cc)) * Vu          # weight contractions
    flops += 2 * 12 * B * Cout * Vu                                     # BN + ReLU, both stages
    bytes_accessed = sum(int(op.size) * op.dtype.itemsize for op in operands)
    bytes_accessed += B * Cout * Vu * 4

    kernel = functools.partial(_fused_kernel, B=B, Cout=Cout, K=K, eps=eps)
    out = pl.pallas_call(
        kernel,
        out_shape=jax.ShapeDtypeStruct((B * Cout, Vu), f32),
        grid=(1,),
        in_specs=[_full_spec(op.shape) for op in operands],
        out_specs=_full_spec((B * Cout, Vu)),
        compiler_params=pltpu.CompilerParams(
            dimension_semantics=("arbitrary",),
            vmem_limit_bytes=64 * 1024 * 1024),
        cost_estimate=pl.CostEstimate(
            flops=int(flops), transcendentals=int(2 * Cout),
            bytes_accessed=int(bytes_accessed)),
    )(*operands)

    # Back to the module's [batch, vertices, channels] convention.
    return out.reshape(B, Cout, Vu).transpose(0, 2, 1)


# ----------------------------------------------------------------------------
# Pure-JAX f32 reference (for a tolerance sanity check)
# ----------------------------------------------------------------------------
def _reference(x, concat_data, lap, params, *, unpool_factor=UNPOOL_FACTOR, eps=1e-5):
    def cheb(xin, w):                     # xin: (B, V, C), w: (K, C, Cout)
        K = w.shape[0]
        terms = [xin]
        if K > 1:
            terms.append(jnp.einsum('vw,bwc->bvc', lap, terms[0]))
            for _ in range(2, K):
                terms.append(2.0 * jnp.einsum('vw,bwc->bvc', lap, terms[-1]) - terms[-2])
        return sum(jnp.einsum('bvc,co->bvo', terms[k], w[k]) for k in range(K))

    def bn_relu(y, g, b):                 # y: (B, V, C); stats over (B, V)
        mean = y.mean(axis=(0, 1), keepdims=True)
        var = ((y - mean) ** 2).mean(axis=(0, 1), keepdims=True)
        return jax.nn.relu((y - mean) * g / jnp.sqrt(var + eps) + b)

    xu = jnp.repeat(x, unpool_factor, axis=1)
    y1 = bn_relu(cheb(xu, params["w1"]), params["g1"], params["b1"])
    y2 = bn_relu(cheb(jnp.concatenate([y1, concat_data], axis=2), params["w2"]),
                 params["g2"], params["b2"])
    return y2


# ----------------------------------------------------------------------------
# Deterministic synthetic parameters + example run
# ----------------------------------------------------------------------------
def make_params(key, in_channels, out_channels, kernel_size):
    k1, k2 = jax.random.split(key)
    # ChebConv weights: (K, Fin, Fout).
    # (ChebConv bias omitted: a per-channel constant before training-mode
    #  BatchNorm is exactly cancelled by the mean subtraction.)
    std1 = (2.0 / (in_channels * kernel_size)) ** 0.5
    w1 = std1 * jax.random.normal(
        k1, (kernel_size, in_channels, out_channels), jnp.float32)
    cin2 = in_channels + out_channels
    std2 = (2.0 / (cin2 * kernel_size)) ** 0.5
    w2 = std2 * jax.random.normal(
        k2, (kernel_size, out_channels + in_channels, out_channels), jnp.float32)
    g1 = jnp.ones((out_channels,), jnp.float32)
    b1 = jnp.zeros((out_channels,), jnp.float32)
    g2 = jnp.ones((out_channels,), jnp.float32)
    b2 = jnp.zeros((out_channels,), jnp.float32)
    return dict(w1=w1, g1=g1, b1=b1, w2=w2, g2=g2, b2=b2)


if __name__ == "__main__":
    B = 2            # batch
    V_in = 16        # vertices before unpooling
    Cin = 4          # in_channels
    Cout = 8         # out_channels (multiple of 8)
    K = 3            # Chebyshev polynomial degree (kernel_size)
    Nv = V_in * UNPOOL_FACTOR  # vertices after unpooling = 64

    key = jax.random.PRNGKey(0)
    kx, kc, kl, kp = jax.random.split(key, 4)

    x = jax.random.normal(kx, (B, V_in, Cin), jnp.float32)
    concat_data = jax.random.normal(kc, (B, Nv, Cin), jnp.float32)

    # Synthetic dense symmetric "laplacian" at the unpooled resolution.
    A = jax.random.normal(kl, (Nv, Nv), jnp.float32)
    lap = 0.5 * (A + A.T) / Nv

    params = make_params(kp, Cin, Cout, K)

    fwd = jax.jit(spherical_cheb_bn_pool_concat)
    out = fwd(x, concat_data, lap, params)
    out = jax.block_until_ready(out)

    assert out.shape == (B, Nv, Cout), out.shape
    assert out.dtype == jnp.float32
    assert bool(jnp.all(jnp.isfinite(out)))

    # Loose tolerance vs. the f32 reference (bf16 MXU operands drift through
    # the K-order recursion and two stages).
    ref = _reference(x, concat_data, lap, params)
    rel = float(jnp.linalg.norm(out - ref) / (jnp.linalg.norm(ref) + 1e-12))
    assert rel < 5e-2, rel

    print("KERNEL_OK")
</pallas_src>

<mosaic_0001>
module attributes {stable_mosaic.version = 11 : i64} {
  func.func @_fused_kernel(%arg0: i32, %arg1: memref<8x64xbf16, #tpu.memory_space<vmem>>, %arg2: memref<8x64xbf16, #tpu.memory_space<vmem>>, %arg3: memref<64x64xbf16, #tpu.memory_space<vmem>>, %arg4: memref<3x16x8xbf16, #tpu.memory_space<vmem>>, %arg5: memref<3x16x16xbf16, #tpu.memory_space<vmem>>, %arg6: memref<3x16x8xbf16, #tpu.memory_space<vmem>>, %arg7: memref<8x1xf32, #tpu.memory_space<vmem>>, %arg8: memref<8x1xf32, #tpu.memory_space<vmem>>, %arg9: memref<8x1xf32, #tpu.memory_space<vmem>>, %arg10: memref<8x1xf32, #tpu.memory_space<vmem>>, %arg11: memref<16x64xf32, #tpu.memory_space<vmem>>) attributes {dimension_semantics = [#tpu.dimension_semantics<arbitrary>], iteration_bounds = array<i64: 1>, scalar_prefetch = 0 : i64, scratch_operands = 0 : i64, tpu.core_type = #tpu.core_type<tc>, window_params = [{pipeline_mode = #tpu.pipeline_mode<synchronous>, transform_indices = @transform_0, window_bounds = array<i64: 8, 64>}, {pipeline_mode = #tpu.pipeline_mode<synchronous>, transform_indices = @transform_1, window_bounds = array<i64: 8, 64>}, {pipeline_mode = #tpu.pipeline_mode<synchronous>, transform_indices = @transform_2, window_bounds = array<i64: 64, 64>}, {pipeline_mode = #tpu.pipeline_mode<synchronous>, transform_indices = @transform_3, window_bounds = array<i64: 3, 16, 8>}, {pipeline_mode = #tpu.pipeline_mode<synchronous>, transform_indices = @transform_4, window_bounds = array<i64: 3, 16, 16>}, {pipeline_mode = #tpu.pipeline_mode<synchronous>, transform_indices = @transform_5, window_bounds = array<i64: 3, 16, 8>}, {pipeline_mode = #tpu.pipeline_mode<synchronous>, transform_indices = @transform_6, window_bounds = array<i64: 8, 1>}, {pipeline_mode = #tpu.pipeline_mode<synchronous>, transform_indices = @transform_7, window_bounds = array<i64: 8, 1>}, {pipeline_mode = #tpu.pipeline_mode<synchronous>, transform_indices = @transform_8, window_bounds = array<i64: 8, 1>}, {pipeline_mode = #tpu.pipeline_mode<synchronous>, transform_indices = @transform_9, window_bounds = array<i64: 8, 1>}, {pipeline_mode = #tpu.pipeline_mode<synchronous>, transform_indices = @transform_10, window_bounds = array<i64: 16, 64>}]} {
    %c0 = arith.constant 0 : index
    %c0_0 = arith.constant 0 : index
    %0 = vector.load %arg3[%c0, %c0_0] : memref<64x64xbf16, #tpu.memory_space<vmem>>, vector<64x64xbf16>
    %c0_1 = arith.constant 0 : index
    %c0_2 = arith.constant 0 : index
    %1 = vector.load %arg1[%c0_1, %c0_2] : memref<8x64xbf16, #tpu.memory_space<vmem>>, vector<8x64xbf16>
    %cst = arith.constant 0.000000e+00 : f32
    %2 = vector.broadcast %cst : f32 to vector<16x64xf32>
    %c0_3 = arith.constant 0 : index
    %c0_4 = arith.constant 0 : index
    %c0_5 = arith.constant 0 : index
    %3 = vector.load %arg4[%c0_3, %c0_4, %c0_5] : memref<3x16x8xbf16, #tpu.memory_space<vmem>>, vector<1x16x8xbf16>
    %4 = vector.shape_cast %3 : vector<1x16x8xbf16> to vector<16x8xbf16>
    %cst_6 = arith.constant dense<0.000000e+00> : vector<16x64xf32>
    %5 = tpu.matmul %4, %1, %cst_6 {dimension_numbers = #tpu.dot_dimension_numbers<[1], [0], [0], [1], [0, 0, 1, 1], [], []>} : vector<16x8xbf16>, vector<8x64xbf16>, vector<16x64xf32> -> vector<16x64xf32>
    %6 = arith.addf %2, %5 : vector<16x64xf32>
    %7 = arith.extf %1 : vector<8x64xbf16> to vector<8x64xf32>
    %cst_7 = arith.constant dense<0.000000e+00> : vector<8x64xf32>
    %8 = tpu.matmul %1, %0, %cst_7 {dimension_numbers = #tpu.dot_dimension_numbers<[1], [0], [0], [1], [0, 0, 1, 1], [], []>} : vector<8x64xbf16>, vector<64x64xbf16>, vector<8x64xf32> -> vector<8x64xf32>
    %cst_8 = arith.constant 5.000000e-01 : f32
    %9 = vector.broadcast %cst_8 : f32 to vector<8x64xf32>
    %10 = arith.mulf %9, %8 : vector<8x64xf32>
    %c1 = arith.constant 1 : index
    %c0_9 = arith.constant 0 : index
    %c0_10 = arith.constant 0 : index
    %11 = vector.load %arg4[%c1, %c0_9, %c0_10] : memref<3x16x8xbf16, #tpu.memory_space<vmem>>, vector<1x16x8xbf16>
    %12 = vector.shape_cast %11 : vector<1x16x8xbf16> to vector<16x8xbf16>
    %13 = arith.truncf %10 : vector<8x64xf32> to vector<8x64xbf16>
    %cst_11 = arith.constant dense<0.000000e+00> : vector<16x64xf32>
    %14 = tpu.matmul %12, %13, %cst_11 {dimension_numbers = #tpu.dot_dimension_numbers<[1], [0], [0], [1], [0, 0, 1, 1], [], []>} : vector<16x8xbf16>, vector<8x64xbf16>, vector<16x64xf32> -> vector<16x64xf32>
    %15 = arith.addf %6, %14 : vector<16x64xf32>
    %16 = arith.truncf %10 : vector<8x64xf32> to vector<8x64xbf16>
    %cst_12 = arith.constant dense<0.000000e+00> : vector<8x64xf32>
    %17 = tpu.matmul %16, %0, %cst_12 {dimension_numbers = #tpu.dot_dimension_numbers<[1], [0], [0], [1], [0, 0, 1, 1], [], []>} : vector<8x64xbf16>, vector<64x64xbf16>, vector<8x64xf32> -> vector<8x64xf32>
    %18 = arith.subf %17, %7 : vector<8x64xf32>
    %c2 = arith.constant 2 : index
    %c0_13 = arith.constant 0 : index
    %c0_14 = arith.constant 0 : index
    %19 = vector.load %arg4[%c2, %c0_13, %c0_14] : memref<3x16x8xbf16, #tpu.memory_space<vmem>>, vector<1x16x8xbf16>
    %20 = vector.shape_cast %19 : vector<1x16x8xbf16> to vector<16x8xbf16>
    %21 = arith.truncf %18 : vector<8x64xf32> to vector<8x64xbf16>
    %cst_15 = arith.constant dense<0.000000e+00> : vector<16x64xf32>
    %22 = tpu.matmul %20, %21, %cst_15 {dimension_numbers = #tpu.dot_dimension_numbers<[1], [0], [0], [1], [0, 0, 1, 1], [], []>} : vector<16x8xbf16>, vector<8x64xbf16>, vector<16x64xf32> -> vector<16x64xf32>
    %23 = arith.addf %15, %22 : vector<16x64xf32>
    %24 = vector.shape_cast %23 : vector<16x64xf32> to vector<2x8x64xf32>
    %cst_16 = arith.constant dense<0.000000e+00> : vector<2x8xf32>
    %25 = vector.multi_reduction <add>, %24, %cst_16 [2] : vector<2x8x64xf32> to vector<2x8xf32>
    %26 = vector.shape_cast %25 : vector<2x8xf32> to vector<2x8x1xf32>
    %cst_17 = arith.constant dense<0.000000e+00> : vector<8x1xf32>
    %27 = vector.multi_reduction <add>, %26, %cst_17 [0] : vector<2x8x1xf32> to vector<8x1xf32>
    %28 = vector.shape_cast %27 : vector<8x1xf32> to vector<1x8x1xf32>
    %cst_18 = arith.constant 1.280000e+02 : f32
    %29 = vector.broadcast %cst_18 : f32 to vector<1x8x1xf32>
    %30 = arith.divf %28, %29 : vector<1x8x1xf32>
    %31 = vector.broadcast %30 : vector<1x8x1xf32> to vector<2x8x64xf32>
    %32 = arith.subf %24, %31 : vector<2x8x64xf32>
    %33 = arith.mulf %32, %32 : vector<2x8x64xf32>
    %cst_19 = arith.constant dense<0.000000e+00> : vector<2x8xf32>
    %34 = vector.multi_reduction <add>, %33, %cst_19 [2] : vector<2x8x64xf32> to vector<2x8xf32>
    %35 = vector.shape_cast %34 : vector<2x8xf32> to vector<2x8x1xf32>
    %cst_20 = arith.constant dense<0.000000e+00> : vector<8x1xf32>
    %36 = vector.multi_reduction <add>, %35, %cst_20 [0] : vector<2x8x1xf32> to vector<8x1xf32>
    %37 = vector.shape_cast %36 : vector<8x1xf32> to vector<1x8x1xf32>
    %cst_21 = arith.constant 1.280000e+02 : f32
    %38 = vector.broadcast %cst_21 : f32 to vector<1x8x1xf32>
    %39 = arith.divf %37, %38 : vector<1x8x1xf32>
    %c0_22 = arith.constant 0 : index
    %c0_23 = arith.constant 0 : index
    %40 = vector.load %arg7[%c0_22, %c0_23] : memref<8x1xf32, #tpu.memory_space<vmem>>, vector<8x1xf32>
    %41 = vector.shape_cast %40 : vector<8x1xf32> to vector<1x8x1xf32>
    %cst_24 = arith.constant 9.99999974E-6 : f32
    %42 = vector.broadcast %cst_24 : f32 to vector<1x8x1xf32>
    %43 = arith.addf %39, %42 : vector<1x8x1xf32>
    %44 = math.rsqrt %43 : vector<1x8x1xf32>
    %45 = arith.mulf %41, %44 : vector<1x8x1xf32>
    %46 = vector.broadcast %45 : vector<1x8x1xf32> to vector<2x8x64xf32>
    %47 = arith.mulf %32, %46 : vector<2x8x64xf32>
    %c0_25 = arith.constant 0 : index
    %c0_26 = arith.constant 0 : index
    %48 = vector.load %arg8[%c0_25, %c0_26] : memref<8x1xf32, #tpu.memory_space<vmem>>, vector<8x1xf32>
    %49 = vector.shape_cast %48 : vector<8x1xf32> to vector<1x8x1xf32>
    %50 = vector.broadcast %49 : vector<1x8x1xf32> to vector<2x8x64xf32>
    %51 = arith.addf %47, %50 : vector<2x8x64xf32>
    %cst_27 = arith.constant 0.000000e+00 : f32
    %52 = vector.broadcast %cst_27 : f32 to vector<2x8x64xf32>
    %53 = arith.maximumf %51, %52 : vector<2x8x64xf32>
    %54 = vector.shape_cast %53 : vector<2x8x64xf32> to vector<16x64xf32>
    %cst_28 = arith.constant 0.000000e+00 : f32
    %55 = vector.broadcast %cst_28 : f32 to vector<16x64xf32>
    %56 = arith.truncf %54 : vector<16x64xf32> to vector<16x64xbf16>
    %c0_29 = arith.constant 0 : index
    %c0_30 = arith.constant 0 : index
    %c0_31 = arith.constant 0 : index
    %57 = vector.load %arg5[%c0_29, %c0_30, %c0_31] : memref<3x16x16xbf16, #tpu.memory_space<vmem>>, vector<1x16x16xbf16>
    %58 = vector.shape_cast %57 : vector<1x16x16xbf16> to vector<16x16xbf16>
    %cst_32 = arith.constant dense<0.000000e+00> : vector<16x64xf32>
    %59 = tpu.matmul %58, %56, %cst_32 {dimension_numbers = #tpu.dot_dimension_numbers<[1], [0], [0], [1], [0, 0, 1, 1], [], []>} : vector<16x16xbf16>, vector<16x64xbf16>, vector<16x64xf32> -> vector<16x64xf32>
    %60 = arith.addf %55, %59 : vector<16x64xf32>
    %cst_33 = arith.constant dense<0.000000e+00> : vector<16x64xf32>
    %61 = tpu.matmul %56, %0, %cst_33 {dimension_numbers = #tpu.dot_dimension_numbers<[1], [0], [0], [1], [0, 0, 1, 1], [], []>} : vector<16x64xbf16>, vector<64x64xbf16>, vector<16x64xf32> -> vector<16x64xf32>
    %cst_34 = arith.constant 5.000000e-01 : f32
    %62 = vector.broadcast %cst_34 : f32 to vector<16x64xf32>
    %63 = arith.mulf %62, %61 : vector<16x64xf32>
    %c1_35 = arith.constant 1 : index
    %c0_36 = arith.constant 0 : index
    %c0_37 = arith.constant 0 : index
    %64 = vector.load %arg5[%c1_35, %c0_36, %c0_37] : memref<3x16x16xbf16, #tpu.memory_space<vmem>>, vector<1x16x16xbf16>
    %65 = vector.shape_cast %64 : vector<1x16x16xbf16> to vector<16x16xbf16>
    %66 = arith.truncf %63 : vector<16x64xf32> to vector<16x64xbf16>
    %cst_38 = arith.constant dense<0.000000e+00> : vector<16x64xf32>
    %67 = tpu.matmul %65, %66, %cst_38 {dimension_numbers = #tpu.dot_dimension_numbers<[1], [0], [0], [1], [0, 0, 1, 1], [], []>} : vector<16x16xbf16>, vector<16x64xbf16>, vector<16x64xf32> -> vector<16x64xf32>
    %68 = arith.addf %60, %67 : vector<16x64xf32>
    %69 = arith.truncf %63 : vector<16x64xf32> to vector<16x64xbf16>
    %cst_39 = arith.constant dense<0.000000e+00> : vector<16x64xf32>
    %70 = tpu.matmul %69, %0, %cst_39 {dimension_numbers = #tpu.dot_dimension_numbers<[1], [0], [0], [1], [0, 0, 1, 1], [], []>} : vector<16x64xbf16>, vector<64x64xbf16>, vector<16x64xf32> -> vector<16x64xf32>
    %71 = arith.subf %70, %54 : vector<16x64xf32>
    %c2_40 = arith.constant 2 : index
    %c0_41 = arith.constant 0 : index
    %c0_42 = arith.constant 0 : index
    %72 = vector.load %arg5[%c2_40, %c0_41, %c0_42] : memref<3x16x16xbf16, #tpu.memory_space<vmem>>, vector<1x16x16xbf16>
    %73 = vector.shape_cast %72 : vector<1x16x16xbf16> to vector<16x16xbf16>
    %74 = arith.truncf %71 : vector<16x64xf32> to vector<16x64xbf16>
    %cst_43 = arith.constant dense<0.000000e+00> : vector<16x64xf32>
    %75 = tpu.matmul %73, %74, %cst_43 {dimension_numbers = #tpu.dot_dimension_numbers<[1], [0], [0], [1], [0, 0, 1, 1], [], []>} : vector<16x16xbf16>, vector<16x64xbf16>, vector<16x64xf32> -> vector<16x64xf32>
    %76 = arith.addf %68, %75 : vector<16x64xf32>
    %c0_44 = arith.constant 0 : index
    %c0_45 = arith.constant 0 : index
    %77 = vector.load %arg2[%c0_44, %c0_45] : memref<8x64xbf16, #tpu.memory_space<vmem>>, vector<8x64xbf16>
    %c0_46 = arith.constant 0 : index
    %c0_47 = arith.constant 0 : index
    %c0_48 = arith.constant 0 : index
    %78 = vector.load %arg6[%c0_46, %c0_47, %c0_48] : memref<3x16x8xbf16, #tpu.memory_space<vmem>>, vector<1x16x8xbf16>
    %79 = vector.shape_cast %78 : vector<1x16x8xbf16> to vector<16x8xbf16>
    %cst_49 = arith.constant dense<0.000000e+00> : vector<16x64xf32>
    %80 = tpu.matmul %79, %77, %cst_49 {dimension_numbers = #tpu.dot_dimension_numbers<[1], [0], [0], [1], [0, 0, 1, 1], [], []>} : vector<16x8xbf16>, vector<8x64xbf16>, vector<16x64xf32> -> vector<16x64xf32>
    %81 = arith.addf %76, %80 : vector<16x64xf32>
    %82 = arith.extf %77 : vector<8x64xbf16> to vector<8x64xf32>
    %cst_50 = arith.constant dense<0.000000e+00> : vector<8x64xf32>
    %83 = tpu.matmul %77, %0, %cst_50 {dimension_numbers = #tpu.dot_dimension_numbers<[1], [0], [0], [1], [0, 0, 1, 1], [], []>} : vector<8x64xbf16>, vector<64x64xbf16>, vector<8x64xf32> -> vector<8x64xf32>
    %cst_51 = arith.constant 5.000000e-01 : f32
    %84 = vector.broadcast %cst_51 : f32 to vector<8x64xf32>
    %85 = arith.mulf %84, %83 : vector<8x64xf32>
    %c1_52 = arith.constant 1 : index
    %c0_53 = arith.constant 0 : index
    %c0_54 = arith.constant 0 : index
    %86 = vector.load %arg6[%c1_52, %c0_53, %c0_54] : memref<3x16x8xbf16, #tpu.memory_space<vmem>>, vector<1x16x8xbf16>
    %87 = vector.shape_cast %86 : vector<1x16x8xbf16> to vector<16x8xbf16>
    %88 = arith.truncf %85 : vector<8x64xf32> to vector<8x64xbf16>
    %cst_55 = arith.constant dense<0.000000e+00> : vector<16x64xf32>
    %89 = tpu.matmul %87, %88, %cst_55 {dimension_numbers = #tpu.dot_dimension_numbers<[1], [0], [0], [1], [0, 0, 1, 1], [], []>} : vector<16x8xbf16>, vector<8x64xbf16>, vector<16x64xf32> -> vector<16x64xf32>
    %90 = arith.addf %81, %89 : vector<16x64xf32>
    %91 = arith.truncf %85 : vector<8x64xf32> to vector<8x64xbf16>
    %cst_56 = arith.constant dense<0.000000e+00> : vector<8x64xf32>
    %92 = tpu.matmul %91, %0, %cst_56 {dimension_numbers = #tpu.dot_dimension_numbers<[1], [0], [0], [1], [0, 0, 1, 1], [], []>} : vector<8x64xbf16>, vector<64x64xbf16>, vector<8x64xf32> -> vector<8x64xf32>
    %93 = arith.subf %92, %82 : vector<8x64xf32>
    %c2_57 = arith.constant 2 : index
    %c0_58 = arith.constant 0 : index
    %c0_59 = arith.constant 0 : index
    %94 = vector.load %arg6[%c2_57, %c0_58, %c0_59] : memref<3x16x8xbf16, #tpu.memory_space<vmem>>, vector<1x16x8xbf16>
    %95 = vector.shape_cast %94 : vector<1x16x8xbf16> to vector<16x8xbf16>
    %96 = arith.truncf %93 : vector<8x64xf32> to vector<8x64xbf16>
    %cst_60 = arith.constant dense<0.000000e+00> : vector<16x64xf32>
    %97 = tpu.matmul %95, %96, %cst_60 {dimension_numbers = #tpu.dot_dimension_numbers<[1], [0], [0], [1], [0, 0, 1, 1], [], []>} : vector<16x8xbf16>, vector<8x64xbf16>, vector<16x64xf32> -> vector<16x64xf32>
    %98 = arith.addf %90, %97 : vector<16x64xf32>
    %99 = vector.shape_cast %98 : vector<16x64xf32> to vector<2x8x64xf32>
    %cst_61 = arith.constant dense<0.000000e+00> : vector<2x8xf32>
    %100 = vector.multi_reduction <add>, %99, %cst_61 [2] : vector<2x8x64xf32> to vector<2x8xf32>
    %101 = vector.shape_cast %100 : vector<2x8xf32> to vector<2x8x1xf32>
    %cst_62 = arith.constant dense<0.000000e+00> : vector<8x1xf32>
    %102 = vector.multi_reduction <add>, %101, %cst_62 [0] : vector<2x8x1xf32> to vector<8x1xf32>
    %103 = vector.shape_cast %102 : vector<8x1xf32> to vector<1x8x1xf32>
    %cst_63 = arith.constant 1.280000e+02 : f32
    %104 = vector.broadcast %cst_63 : f32 to vector<1x8x1xf32>
    %105 = arith.divf %103, %104 : vector<1x8x1xf32>
    %106 = vector.broadcast %105 : vector<1x8x1xf32> to vector<2x8x64xf32>
    %107 = arith.subf %99, %106 : vector<2x8x64xf32>
    %108 = arith.mulf %107, %107 : vector<2x8x64xf32>
    %cst_64 = arith.constant dense<0.000000e+00> : vector<2x8xf32>
    %109 = vector.multi_reduction <add>, %108, %cst_64 [2] : vector<2x8x64xf32> to vector<2x8xf32>
    %110 = vector.shape_cast %109 : vector<2x8xf32> to vector<2x8x1xf32>
    %cst_65 = arith.constant dense<0.000000e+00> : vector<8x1xf32>
    %111 = vector.multi_reduction <add>, %110, %cst_65 [0] : vector<2x8x1xf32> to vector<8x1xf32>
    %112 = vector.shape_cast %111 : vector<8x1xf32> to vector<1x8x1xf32>
    %cst_66 = arith.constant 1.280000e+02 : f32
    %113 = vector.broadcast %cst_66 : f32 to vector<1x8x1xf32>
    %114 = arith.divf %112, %113 : vector<1x8x1xf32>
    %c0_67 = arith.constant 0 : index
    %c0_68 = arith.constant 0 : index
    %115 = vector.load %arg9[%c0_67, %c0_68] : memref<8x1xf32, #tpu.memory_space<vmem>>, vector<8x1xf32>
    %116 = vector.shape_cast %115 : vector<8x1xf32> to vector<1x8x1xf32>
    %cst_69 = arith.constant 9.99999974E-6 : f32
    %117 = vector.broadcast %cst_69 : f32 to vector<1x8x1xf32>
    %118 = arith.addf %114, %117 : vector<1x8x1xf32>
    %119 = math.rsqrt %118 : vector<1x8x1xf32>
    %120 = arith.mulf %116, %119 : vector<1x8x1xf32>
    %121 = vector.broadcast %120 : vector<1x8x1xf32> to vector<2x8x64xf32>
    %122 = arith.mulf %107, %121 : vector<2x8x64xf32>
    %c0_70 = arith.constant 0 : index
    %c0_71 = arith.constant 0 : index
    %123 = vector.load %arg10[%c0_70, %c0_71] : memref<8x1xf32, #tpu.memory_space<vmem>>, vector<8x1xf32>
    %124 = vector.shape_cast %123 : vector<8x1xf32> to vector<1x8x1xf32>
    %125 = vector.broadcast %124 : vector<1x8x1xf32> to vector<2x8x64xf32>
    %126 = arith.addf %122, %125 : vector<2x8x64xf32>
    %cst_72 = arith.constant 0.000000e+00 : f32
    %127 = vector.broadcast %cst_72 : f32 to vector<2x8x64xf32>
    %128 = arith.maximumf %126, %127 : vector<2x8x64xf32>
    %129 = vector.shape_cast %128 : vector<2x8x64xf32> to vector<16x64xf32>
    %c0_73 = arith.constant 0 : index
    %c0_74 = arith.constant 0 : index
    %130 = vector.load %arg11[%c0_73, %c0_74] : memref<16x64xf32, #tpu.memory_space<vmem>>, vector<16x64xf32>
    tpu.vector_store %arg11[%c0_73, %c0_74], %129 {strides = array<i32>} : memref<16x64xf32, #tpu.memory_space<vmem>>, vector<16x64xf32>,
    return
  }
  func.func @transform_0(%arg0: i32) -> (i32, i32) {
    %c0_i32 = arith.constant 0 : i32
    %c0_i32_0 = arith.constant 0 : i32
    %c0_i32_1 = arith.constant 0 : i32
    return %c0_i32, %c0_i32_0 : i32, i32
  }
  func.func @transform_1(%arg0: i32) -> (i32, i32) {
    %c0_i32 = arith.constant 0 : i32
    %c0_i32_0 = arith.constant 0 : i32
    %c0_i32_1 = arith.constant 0 : i32
    return %c0_i32, %c0_i32_0 : i32, i32
  }
  func.func @transform_2(%arg0: i32) -> (i32, i32) {
    %c0_i32 = arith.constant 0 : i32
    %c0_i32_0 = arith.constant 0 : i32
    %c0_i32_1 = arith.constant 0 : i32
    return %c0_i32, %c0_i32_0 : i32, i32
  }
  func.func @transform_3(%arg0: i32) -> (i32, i32, i32) {
    %c0_i32 = arith.constant 0 : i32
    %c0_i32_0 = arith.constant 0 : i32
    %c0_i32_1 = arith.constant 0 : i32
    %c0_i32_2 = arith.constant 0 : i32
    return %c0_i32, %c0_i32_0, %c0_i32_1 : i32, i32, i32
  }
  func.func @transform_4(%arg0: i32) -> (i32, i32, i32) {
    %c0_i32 = arith.constant 0 : i32
    %c0_i32_0 = arith.constant 0 : i32
    %c0_i32_1 = arith.constant 0 : i32
    %c0_i32_2 = arith.constant 0 : i32
    return %c0_i32, %c0_i32_0, %c0_i32_1 : i32, i32, i32
  }
  func.func @transform_5(%arg0: i32) -> (i32, i32, i32) {
    %c0_i32 = arith.constant 0 : i32
    %c0_i32_0 = arith.constant 0 : i32
    %c0_i32_1 = arith.constant 0 : i32
    %c0_i32_2 = arith.constant 0 : i32
    return %c0_i32, %c0_i32_0, %c0_i32_1 : i32, i32, i32
  }
  func.func @transform_6(%arg0: i32) -> (i32, i32) {
    %c0_i32 = arith.constant 0 : i32
    %c0_i32_0 = arith.constant 0 : i32
    %c0_i32_1 = arith.constant 0 : i32
    return %c0_i32, %c0_i32_0 : i32, i32
  }
  func.func @transform_7(%arg0: i32) -> (i32, i32) {
    %c0_i32 = arith.constant 0 : i32
    %c0_i32_0 = arith.constant 0 : i32
    %c0_i32_1 = arith.constant 0 : i32
    return %c0_i32, %c0_i32_0 : i32, i32
  }
  func.func @transform_8(%arg0: i32) -> (i32, i32) {
    %c0_i32 = arith.constant 0 : i32
    %c0_i32_0 = arith.constant 0 : i32
    %c0_i32_1 = arith.constant 0 : i32
    return %c0_i32, %c0_i32_0 : i32, i32
  }
  func.func @transform_9(%arg0: i32) -> (i32, i32) {
    %c0_i32 = arith.constant 0 : i32
    %c0_i32_0 = arith.constant 0 : i32
    %c0_i32_1 = arith.constant 0 : i32
    return %c0_i32, %c0_i32_0 : i32, i32
  }
  func.func @transform_10(%arg0: i32) -> (i32, i32) {
    %c0_i32 = arith.constant 0 : i32
    %c0_i32_0 = arith.constant 0 : i32
    %c0_i32_1 = arith.constant 0 : i32
    return %c0_i32, %c0_i32_0 : i32, i32
  }
}

</mosaic_0001>

<llo_original>
// kernel: spherical_cheb_bn_pool_concat.1
$region0: #{spherical_cheb_bn_pool_concat.1}
  #allocation0 [shape = 'u32[]', space=smem, size = 0x4, offset = 0x4, fixed_abs, tag = 'smem constant byte address 0x4 - core index']
  #allocation1 [shape = 'u32[144,128]{1,0:T(1,128)}', space=vmem, size = 0x12000, scoped, tag = 'internal scratch']
  %s0 = inlined_call_operand.vmem [shape: bf16[8,64], index: 0, kind: input, shape index: {}]
  %s1 = inlined_call_operand.vmem [shape: bf16[8,64], index: 1, kind: input, shape index: {}]
  %s2 = inlined_call_operand.vmem [shape: bf16[64,64], index: 2, kind: input, shape index: {}]
  %s3 = inlined_call_operand.vmem [shape: bf16[3,16,8], index: 3, kind: input, shape index: {}]
  %s4 = inlined_call_operand.vmem [shape: bf16[3,16,16], index: 4, kind: input, shape index: {}]
  %s5 = inlined_call_operand.vmem [shape: bf16[3,16,8], index: 5, kind: input, shape index: {}]
  %s6 = inlined_call_operand.vmem [shape: f32[8,1], index: 6, kind: input, shape index: {}]
  %s7 = inlined_call_operand.vmem [shape: f32[8,1], index: 7, kind: input, shape index: {}]
  %s8 = inlined_call_operand.vmem [shape: f32[8,1], index: 8, kind: input, shape index: {}]
  %s9 = inlined_call_operand.vmem [shape: f32[8,1], index: 9, kind: input, shape index: {}]
  %s10 = inlined_call_operand.hbm [shape: f32[16,64], index: 10, kind: output, shape index: {}]
  %s11 = sld [smem:[#allocation0]]
  $region50: #{spherical_cheb_bn_pool_concat.1} parent=0
    _
  %s13 = ssub.s32 1, %s11
  %s14 = scalar_select 0, %s13, %s11
  $region1: #{spherical_cheb_bn_pool_concat.1} parent=0
    #allocation2 [shape = 'u8[8192]{0}', space=vmem, size = 0x2000, scoped, tag = 'output window, operand 0, single buffered']
    #allocation3 [shape = 's32[1]{0}', space=sflag, size = 0x4, scoped, tag = 'scoped memory for spherical_cheb_bn_pool_concat.1']
    %15 = vsyncpa [#allocation3], 0
    // Predicated region
    $region2: #{spherical_cheb_bn_pool_concat.1} parent=1 // pred_check
      _
    $region3: #{spherical_cheb_bn_pool_concat.1} parent=1 // pred_check_branch
      %17 = sbr.rel (0) target = $region5
    $region4: #{spherical_cheb_bn_pool_concat.1} parent=1 // pred_region
      _
    $region5: #{spherical_cheb_bn_pool_concat.1} parent=1 // pred_fallthru
      _
    // Predicated region
    $region6: #{spherical_cheb_bn_pool_concat.1} parent=1 // pred_check
      _
    $region7: #{spherical_cheb_bn_pool_concat.1} parent=1 // pred_check_branch
      %19 = sbr.rel (0) target = $region9
    $region8: #{spherical_cheb_bn_pool_concat.1} parent=1 // pred_region
      _
    $region9: #{spherical_cheb_bn_pool_concat.1} parent=1 // pred_fallthru
      _
    // Predicated region
    $region10: #{spherical_cheb_bn_pool_concat.1} parent=1 // pred_check
      _
    $region11: #{spherical_cheb_bn_pool_concat.1} parent=1 // pred_check_branch
      %21 = sbr.rel (0) target = $region13
    $region12: #{spherical_cheb_bn_pool_concat.1} parent=1 // pred_region
      _
    $region13: #{spherical_cheb_bn_pool_concat.1} parent=1 // pred_fallthru
      _
    // Predicated region
    $region14: #{spherical_cheb_bn_pool_concat.1} parent=1 // pred_check
      _
    $region15: #{spherical_cheb_bn_pool_concat.1} parent=1 // pred_check_branch
      %23 = sbr.rel (0) target = $region17
    $region16: #{spherical_cheb_bn_pool_concat.1} parent=1 // pred_region
      _
    $region17: #{spherical_cheb_bn_pool_concat.1} parent=1 // pred_fallthru
      _
    // Predicated region
    $region18: #{spherical_cheb_bn_pool_concat.1} parent=1 // pred_check
      _
    $region19: #{spherical_cheb_bn_pool_concat.1} parent=1 // pred_check_branch
      %25 = sbr.rel (0) target = $region21
    $region20: #{spherical_cheb_bn_pool_concat.1} parent=1 // pred_region
      _
    $region21: #{spherical_cheb_bn_pool_concat.1} parent=1 // pred_fallthru
      _
    // Predicated region
    $region22: #{spherical_cheb_bn_pool_concat.1} parent=1 // pred_check
      _
    $region23: #{spherical_cheb_bn_pool_concat.1} parent=1 // pred_check_branch
      %27 = sbr.rel (0) target = $region25
    $region24: #{spherical_cheb_bn_pool_concat.1} parent=1 // pred_region
      _
    $region25: #{spherical_cheb_bn_pool_concat.1} parent=1 // pred_fallthru
      _
    // Predicated region
    $region26: #{spherical_cheb_bn_pool_concat.1} parent=1 // pred_check
      _
    $region27: #{spherical_cheb_bn_pool_concat.1} parent=1 // pred_check_branch
      %29 = sbr.rel (0) target = $region29
    $region28: #{spherical_cheb_bn_pool_concat.1} parent=1 // pred_region
      _
    $region29: #{spherical_cheb_bn_pool_concat.1} parent=1 // pred_fallthru
      _
    // Predicated region
    $region30: #{spherical_cheb_bn_pool_concat.1} parent=1 // pred_check
      _
    $region31: #{spherical_cheb_bn_pool_concat.1} parent=1 // pred_check_branch
      %31 = sbr.rel (0) target = $region33
    $region32: #{spherical_cheb_bn_pool_concat.1} parent=1 // pred_region
      _
    $region33: #{spherical_cheb_bn_pool_concat.1} parent=1 // pred_fallthru
      _
    // Predicated region
    $region34: #{spherical_cheb_bn_pool_concat.1} parent=1 // pred_check
      _
    $region35: #{spherical_cheb_bn_pool_concat.1} parent=1 // pred_check_branch
      %33 = sbr.rel (0) target = $region37
    $region36: #{spherical_cheb_bn_pool_concat.1} parent=1 // pred_region
      _
    $region37: #{spherical_cheb_bn_pool_concat.1} parent=1 // pred_fallthru
      _
    // Predicated region
    $region38: #{spherical_cheb_bn_pool_concat.1} parent=1 // pred_check
      _
    $region39: #{spherical_cheb_bn_pool_concat.1} parent=1 // pred_check_branch
      %35 = sbr.rel (0) target = $region41
    $region40: #{spherical_cheb_bn_pool_concat.1} parent=1 // pred_region
      _
    $region41: #{spherical_cheb_bn_pool_concat.1} parent=1 // pred_fallthru
      _
    %v37 = vld [vmem:[%s2] sm:$0xf]
    %v38 = vld [vmem:[%s2 + $0x4] sm:$0xf]
    %v39 = vld [vmem:[%s2 + $0x8] sm:$0xf]
    %v40 = vld [vmem:[%s2 + $0xc] sm:$0xf]
    %v41 = vld [vmem:[%s2 + $0x10] sm:$0xf]
    %v42 = vld [vmem:[%s2 + $0x14] sm:$0xf]
    %v43 = vld [vmem:[%s2 + $0x18] sm:$0xf]
    %v44 = vld [vmem:[%s2 + $0x1c] sm:$0xf]
    %v45 = vld [vmem:[%s0] sm:$0xf]
    %v46 = vld [vmem:[%s3] sm:$0xf]
    %v47 = vld [vmem:[%s3 + $0x4] sm:$0xf]
    %v48 = vunpack.c.l.bf16 %v45
    %v57 = vunpack.c.l.b16 %v37
    %v58 = vunpack.c.l.b16 %v38
    %v59 = vunpack.c.l.b16 %v39
    %v60 = vunpack.c.l.b16 %v40
    %v61 = vunpack.c.l.b16 %v41
    %v62 = vunpack.c.l.b16 %v42
    %v63 = vunpack.c.l.b16 %v43
    %v64 = vunpack.c.l.b16 %v44
    %v65 = vpack.c.b16 %v58, %v57
    %v66 = vpack.c.b16 %v60, %v59
    %v67 = vpack.c.b16 %v62, %v61
    %v68 = vpack.c.b16 %v64, %v63
    %vm73 = vcmask 523264
    %v75 = vsel %vm73, %v45, 0
    %77 = vmatprep.subr.bf16.mxu0 0
    %78 = vmatpush1.bf16.msra.mxu0 0
    %79 = vmatprep.subr.bf16.mxu0 0
    %80 = vmatpush1.bf16.msra.mxu0 0
    %81 = vmatprep.subr.bf16.mxu0 0
    %82 = vmatpush1.bf16.msra.mxu0 0
    %83 = vmatprep.subr.bf16.mxu0 0
    %84 = vmatpush1.bf16.msra.mxu0 0
    %85 = vmatprep.subr.bf16.mxu0 0
    %86 = vmatpush1.bf16.msra.mxu0 %v68
    %87 = vmatprep.subr.bf16.mxu0 0
    %88 = vmatpush1.bf16.msra.mxu0 %v67
    %89 = vmatprep.subr.bf16.mxu0 0
    %90 = vmatpush1.bf16.msra.mxu0 %v66
    %91 = vmatprep.subr.bf16.mxu0 0
    %92 = vmatpush1.bf16.msra.mxu0 %v65
    %93 = vmatprep.subr.bf16.mxu0 0
    %94 = vmatpush2.bf16.msra.mxu0 0
    %95 = vmatprep.subr.bf16.mxu0 0
    %96 = vmatpush2.bf16.msra.mxu0 0
    %97 = vmatprep.subr.bf16.mxu0 0
    %98 = vmatpush2.bf16.msra.mxu0 0
    %99 = vmatprep.subr.bf16.mxu0 0
    %100 = vmatpush2.bf16.msra.mxu0 0
    %101 = vmatprep.subr.bf16.mxu0 0
    %102 = vmatpush2.bf16.msra.mxu0 0
    %103 = vmatprep.subr.bf16.mxu0 0
    %104 = vmatpush2.bf16.msra.mxu0 0
    %105 = vmatprep.subr.bf16.mxu0 0
    %106 = vmatpush2.bf16.msra.mxu0 0
    %107 = vmatprep.subr.bf16.mxu0 0
    %108 = vmatpush2.bf16.msra.mxu0 0
    %109 = vmatprep.mubr.bf16.mxu0 0
    %110 = vmatmul.mubr.bf16.gmra.mxu0 %v75
    %v111 = vpop.f32.mrf.mxu0
    %v112 = vadd.f32 0.0, %v111
    %v113 = vpop.f32.mrf.mxu0
    %v114 = vpop.f32.mrf.mxu0
    %v115 = vpop.f32.mrf.mxu0
    %116 = vdwg.mxu0
    %v117 = vmul.f32 %v112, 0.5
    %s118 = scalar_lea.vmem %s3, 8
    %v119 = vld [vmem:[%s118] sm:$0xf]
    %v120 = vld [vmem:[%s118 + $0x4] sm:$0xf]
    %v121 = vpack.c.bf16 %v117, %v117
    %v124 = vunpack.c.l.b16 %v119
    %v125 = vunpack.c.l.b16 %v120
    %v126 = vpack.c.b16 %v125, %v124
    %vm127 = vcmask 64512
    %v129 = vsel %vm127, %v126, 0
    %vm131 = vcmask 1043456
    %v133 = vsel %vm131, %v121, 0
    %135 = vmatprep.subr.bf16.mxu0 0
    %136 = vmatpush1.bf16.msra.mxu0 0
    %137 = vmatprep.subr.bf16.mxu0 0
    %138 = vmatpush1.bf16.msra.mxu0 0
    %139 = vmatprep.subr.bf16.mxu0 0
    %140 = vmatpush1.bf16.msra.mxu0 0
    %141 = vmatprep.subr.bf16.mxu0 0
    %142 = vmatpush1.bf16.msra.mxu0 0
    %143 = vmatprep.subr.bf16.mxu0 0
    %144 = vmatpush1.bf16.msra.mxu0 0
    %145 = vmatprep.subr.bf16.mxu0 0
    %146 = vmatpush1.bf16.msra.mxu0 0
    %147 = vmatprep.subr.bf16.mxu0 0
    %148 = vmatpush1.bf16.msra.mxu0 0
    %149 = vmatprep.subr.bf16.mxu0 0
    %150 = vmatpush1.bf16.msra.mxu0 %v133
    %151 = vmatprep.subr.bf16.mxu0 0
    %152 = vmatpush2.bf16.msra.mxu0 0
    %153 = vmatprep.subr.bf16.mxu0 0
    %154 = vmatpush2.bf16.msra.mxu0 0
    %155 = vmatprep.subr.bf16.mxu0 0
    %156 = vmatpush2.bf16.msra.mxu0 0
    %157 = vmatprep.subr.bf16.mxu0 0
    %158 = vmatpush2.bf16.msra.mxu0 0
    %159 = vmatprep.subr.bf16.mxu0 0
    %160 = vmatpush2.bf16.msra.mxu0 0
    %161 = vmatprep.subr.bf16.mxu0 0
    %162 = vmatpush2.bf16.msra.mxu0 0
    %163 = vmatprep.subr.bf16.mxu0 0
    %164 = vmatpush2.bf16.msra.mxu0 0
    %165 = vmatprep.subr.bf16.mxu0 0
    %166 = vmatpush2.bf16.msra.mxu0 0
    %167 = vmatprep.mubr.bf16.mxu0 0
    %168 = vmatmul.mubr.bf16.gmra.mxu0 %v129
    %v169 = vpop.f32.mrf.mxu0
    %v170 = vadd.f32 0.0, %v169
    %v171 = vpop.f32.mrf.mxu0
    %v172 = vpop.f32.mrf.mxu0
    %v173 = vadd.f32 0.0, %v172
    %v174 = vpop.f32.mrf.mxu0
    %175 = vdwg.mxu0
    %v178 = vunpack.c.l.b16 %v46
    %v179 = vunpack.c.l.b16 %v47
    %v180 = vpack.c.b16 %v179, %v178
    %v182 = vsel %vm127, %v180, 0
    %v184 = vsel %vm131, %v45, 0
    %186 = vmatprep.subr.bf16.mxu0 0
    %187 = vmatpush1.bf16.msra.mxu0 0
    %188 = vmatprep.subr.bf16.mxu0 0
    %189 = vmatpush1.bf16.msra.mxu0 0
    %190 = vmatprep.subr.bf16.mxu0 0
    %191 = vmatpush1.bf16.msra.mxu0 0
    %192 = vmatprep.subr.bf16.mxu0 0
    %193 = vmatpush1.bf16.msra.mxu0 0
    %194 = vmatprep.subr.bf16.mxu0 0
    %195 = vmatpush1.bf16.msra.mxu0 0
    %196 = vmatprep.subr.bf16.mxu0 0
    %197 = vmatpush1.bf16.msra.mxu0 0
    %198 = vmatprep.subr.bf16.mxu0 0
    %199 = vmatpush1.bf16.msra.mxu0 0
    %200 = vmatprep.subr.bf16.mxu0 0
    %201 = vmatpush1.bf16.msra.mxu0 %v184
    %202 = vmatprep.subr.bf16.mxu0 0
    %203 = vmatpush2.bf16.msra.mxu0 0
    %204 = vmatprep.subr.bf16.mxu0 0
    %205 = vmatpush2.bf16.msra.mxu0 0
    %206 = vmatprep.subr.bf16.mxu0 0
    %207 = vmatpush2.bf16.msra.mxu0 0
    %208 = vmatprep.subr.bf16.mxu0 0
    %209 = vmatpush2.bf16.msra.mxu0 0
    %210 = vmatprep.subr.bf16.mxu0 0
    %211 = vmatpush2.bf16.msra.mxu0 0
    %212 = vmatprep.subr.bf16.mxu0 0
    %213 = vmatpush2.bf16.msra.mxu0 0
    %214 = vmatprep.subr.bf16.mxu0 0
    %215 = vmatpush2.bf16.msra.mxu0 0
    %216 = vmatprep.subr.bf16.mxu0 0
    %217 = vmatpush2.bf16.msra.mxu0 0
    %218 = vmatprep.mubr.bf16.mxu0 0
    %219 = vmatmul.mubr.bf16.gmra.mxu0 %v182
    %v220 = vpop.f32.mrf.mxu0
    %v221 = vadd.f32 %v170, %v220
    %v222 = vpop.f32.mrf.mxu0
    %v223 = vpop.f32.mrf.mxu0
    %v224 = vadd.f32 %v173, %v223
    %v225 = vpop.f32.mrf.mxu0
    %226 = vdwg.mxu0
    %v227 = vsel %vm73, %v121, 0
    %229 = vmatprep.subr.bf16.mxu0 0
    %230 = vmatpush1.bf16.msra.mxu0 0
    %231 = vmatprep.subr.bf16.mxu0 0
    %232 = vmatpush1.bf16.msra.mxu0 0
    %233 = vmatprep.subr.bf16.mxu0 0
    %234 = vmatpush1.bf16.msra.mxu0 0
    %235 = vmatprep.subr.bf16.mxu0 0
    %236 = vmatpush1.bf16.msra.mxu0 0
    %237 = vmatprep.subr.bf16.mxu0 0
    %238 = vmatpush1.bf16.msra.mxu0 %v68
    %239 = vmatprep.subr.bf16.mxu0 0
    %240 = vmatpush1.bf16.msra.mxu0 %v67
    %241 = vmatprep.subr.bf16.mxu0 0
    %242 = vmatpush1.bf16.msra.mxu0 %v66
    %243 = vmatprep.subr.bf16.mxu0 0
    %244 = vmatpush1.bf16.msra.mxu0 %v65
    %245 = vmatprep.subr.bf16.mxu0 0
    %246 = vmatpush2.bf16.msra.mxu0 0
    %247 = vmatprep.subr.bf16.mxu0 0
    %248 = vmatpush2.bf16.msra.mxu0 0
    %249 = vmatprep.subr.bf16.mxu0 0
    %250 = vmatpush2.bf16.msra.mxu0 0
    %251 = vmatprep.subr.bf16.mxu0 0
    %252 = vmatpush2.bf16.msra.mxu0 0
    %253 = vmatprep.subr.bf16.mxu0 0
    %254 = vmatpush2.bf16.msra.mxu0 0
    %255 = vmatprep.subr.bf16.mxu0 0
    %256 = vmatpush2.bf16.msra.mxu0 0
    %257 = vmatprep.subr.bf16.mxu0 0
    %258 = vmatpush2.bf16.msra.mxu0 0
    %259 = vmatprep.subr.bf16.mxu0 0
    %260 = vmatpush2.bf16.msra.mxu0 0
    %261 = vmatprep.mubr.bf16.mxu0 0
    %262 = vmatmul.mubr.bf16.gmra.mxu0 %v227
    %v263 = vpop.f32.mrf.mxu0
    %v264 = vadd.f32 0.0, %v263
    %v265 = vpop.f32.mrf.mxu0
    %v266 = vpop.f32.mrf.mxu0
    %v267 = vpop.f32.mrf.mxu0
    %268 = vdwg.mxu0
    %v269 = vsub.f32 %v264, %v48
    %s270 = scalar_lea.vmem %s3, 16
    %v271 = vld [vmem:[%s270] sm:$0xf]
    %v272 = vld [vmem:[%s270 + $0x4] sm:$0xf]
    %v273 = vpack.c.bf16 %v269, %v269
    %v276 = vunpack.c.l.b16 %v271
    %v277 = vunpack.c.l.b16 %v272
    %v278 = vpack.c.b16 %v277, %v276
    %v280 = vsel %vm127, %v278, 0
    %v283 = vsel %vm131, %v273, 0
    %285 = vmatprep.subr.bf16.mxu0 0
    %286 = vmatpush1.bf16.msra.mxu0 0
    %287 = vmatprep.subr.bf16.mxu0 0
    %288 = vmatpush1.bf16.msra.mxu0 0
    %289 = vmatprep.subr.bf16.mxu0 0
    %290 = vmatpush1.bf16.msra.mxu0 0
    %291 = vmatprep.subr.bf16.mxu0 0
    %292 = vmatpush1.bf16.msra.mxu0 0
    %293 = vmatprep.subr.bf16.mxu0 0
    %294 = vmatpush1.bf16.msra.mxu0 0
    %295 = vmatprep.subr.bf16.mxu0 0
    %296 = vmatpush1.bf16.msra.mxu0 0
    %297 = vmatprep.subr.bf16.mxu0 0
    %298 = vmatpush1.bf16.msra.mxu0 0
    %299 = vmatprep.subr.bf16.mxu0 0
    %300 = vmatpush1.bf16.msra.mxu0 %v283
    %301 = vmatprep.subr.bf16.mxu0 0
    %302 = vmatpush2.bf16.msra.mxu0 0
    %303 = vmatprep.subr.bf16.mxu0 0
    %304 = vmatpush2.bf16.msra.mxu0 0
    %305 = vmatprep.subr.bf16.mxu0 0
    %306 = vmatpush2.bf16.msra.mxu0 0
    %307 = vmatprep.subr.bf16.mxu0 0
    %308 = vmatpush2.bf16.msra.mxu0 0
    %309 = vmatprep.subr.bf16.mxu0 0
    %310 = vmatpush2.bf16.msra.mxu0 0
    %311 = vmatprep.subr.bf16.mxu0 0
    %312 = vmatpush2.bf16.msra.mxu0 0
    %313 = vmatprep.subr.bf16.mxu0 0
    %314 = vmatpush2.bf16.msra.mxu0 0
    %315 = vmatprep.subr.bf16.mxu0 0
    %316 = vmatpush2.bf16.msra.mxu0 0
    %317 = vmatprep.mubr.bf16.mxu0 0
    %318 = vmatmul.mubr.bf16.gmra.mxu0 %v280
    %v319 = vpop.f32.mrf.mxu0
    %v320 = vadd.f32 0.0, %v319
    %v321 = vpop.f32.mrf.mxu0
    %v322 = vpop.f32.mrf.mxu0
    %v323 = vadd.f32 0.0, %v322
    %v324 = vpop.f32.mrf.mxu0
    %325 = vdwg.mxu0
    %v326 = vadd.f32 %v221, %v320
    %v327 = vadd.f32 %v224, %v323
    %v328 = vsel %vm73, %v326, 0.0
    %329 = vadd.xlane.f32.xlu0 %v328
    %v330 = vpop.xlane.xlu0 %329
    %v331 = vsel %vm73, %v327, 0.0
    %332 = vadd.xlane.f32.xlu0 %v331
    %v333 = vpop.xlane.xlu0 %332
    %v334 = vadd.f32 %v330, %v333
    %v335 = vrcp.pop 128.0
    %v336 = vmul.f32 %v334, %v335
    %v337 = vsub.f32 %v326, %v336
    %v338 = vsub.f32 %v327, %v336
    %v339 = vmul.f32 %v337, %v337
    %v340 = vmul.f32 %v338, %v338
    %v341 = vsel %vm73, %v339, 0.0
    %342 = vadd.xlane.f32.xlu0 %v341
    %v343 = vpop.xlane.xlu0 %342
    %v344 = vsel %vm73, %v340, 0.0
    %345 = vadd.xlane.f32.xlu0 %v344
    %v346 = vpop.xlane.xlu0 %345
    %v347 = vadd.f32 %v343, %v346
    %v348 = vmul.f32 %v347, %v335
    %v349 = vld [vmem:[%s6] sm:$0xff]
    %v350 = vadd.f32 %v348, 1e-05
    %v351 = vrsqrt.pop %v350
    %v352 = vmul.f32 %v349, %v351
    %354 = vset.pattern.permute.xlu0 0
    %355 = vperm.xlu0 %354, %v352
    %v356 = vpop.permute.xlu0 %355
    %v358 = vmul.f32 %v337, %v356
    %v359 = vmul.f32 %v338, %v356
    %v360 = vld [vmem:[%s7] sm:$0xff]
    %362 = vset.pattern.permute.xlu0 0
    %363 = vperm.xlu0 %362, %v360
    %v364 = vpop.permute.xlu0 %363
    %v366 = vadd.f32 %v358, %v364
    %v367 = vadd.f32 %v359, %v364
    %v368 = vmax.f32 %v366, 0.0
    %v369 = vmax.f32 %v367, 0.0
    %v370 = vpack.c.bf16 %v369, %v368
    %v371 = vld [vmem:[%s4] sm:$0xf]
    %v372 = vld [vmem:[%s4 + $0x4] sm:$0xf]
    %v374 = vsel %vm73, %v370, 0
    %376 = vmatprep.subr.bf16.mxu0 0
    %377 = vmatpush1.bf16.msra.mxu0 0
    %378 = vmatprep.subr.bf16.mxu0 0
    %379 = vmatpush1.bf16.msra.mxu0 0
    %380 = vmatprep.subr.bf16.mxu0 0
    %381 = vmatpush1.bf16.msra.mxu0 0
    %382 = vmatprep.subr.bf16.mxu0 0
    %383 = vmatpush1.bf16.msra.mxu0 0
    %384 = vmatprep.subr.bf16.mxu0 0
    %385 = vmatpush1.bf16.msra.mxu0 %v68
    %386 = vmatprep.subr.bf16.mxu0 0
    %387 = vmatpush1.bf16.msra.mxu0 %v67
    %388 = vmatprep.subr.bf16.mxu0 0
    %389 = vmatpush1.bf16.msra.mxu0 %v66
    %390 = vmatprep.subr.bf16.mxu0 0
    %391 = vmatpush1.bf16.msra.mxu0 %v65
    %392 = vmatprep.subr.bf16.mxu0 0
    %393 = vmatpush2.bf16.msra.mxu0 0
    %394 = vmatprep.subr.bf16.mxu0 0
    %395 = vmatpush2.bf16.msra.mxu0 0
    %396 = vmatprep.subr.bf16.mxu0 0
    %397 = vmatpush2.bf16.msra.mxu0 0
    %398 = vmatprep.subr.bf16.mxu0 0
    %399 = vmatpush2.bf16.msra.mxu0 0
    %400 = vmatprep.subr.bf16.mxu0 0
    %401 = vmatpush2.bf16.msra.mxu0 0
    %402 = vmatprep.subr.bf16.mxu0 0
    %403 = vmatpush2.bf16.msra.mxu0 0
    %404 = vmatprep.subr.bf16.mxu0 0
    %405 = vmatpush2.bf16.msra.mxu0 0
    %406 = vmatprep.subr.bf16.mxu0 0
    %407 = vmatpush2.bf16.msra.mxu0 0
    %408 = vmatprep.mubr.bf16.mxu0 0
    %409 = vmatmul.mubr.bf16.gmra.mxu0 %v374
    %v410 = vpop.f32.mrf.mxu0
    %v411 = vadd.f32 0.0, %v410
    %v412 = vpop.f32.mrf.mxu0
    %v413 = vpop.f32.mrf.mxu0
    %v414 = vadd.f32 0.0, %v413
    %v415 = vpop.f32.mrf.mxu0
    %416 = vdwg.mxu0
    %v417 = vmul.f32 %v411, 0.5
    %v418 = vmul.f32 %v414, 0.5
    %s419 = scalar_lea.vmem %s4, 8
    %v420 = vld [vmem:[%s419] sm:$0xf]
    %v421 = vld [vmem:[%s419 + $0x4] sm:$0xf]
    %v422 = vpack.c.bf16 %v418, %v417
    %v425 = vunpack.c.l.b16 %v420
    %v426 = vunpack.c.l.b16 %v421
    %v427 = vpack.c.b16 %v426, %v425
    %vm428 = vcmask 130048
    %v430 = vsel %vm428, %v427, 0
    %432 = vmatprep.subr.bf16.mxu0 0
    %433 = vmatpush1.bf16.msra.mxu0 0
    %434 = vmatprep.subr.bf16.mxu0 0
    %435 = vmatpush1.bf16.msra.mxu0 0
    %436 = vmatprep.subr.bf16.mxu0 0
    %437 = vmatpush1.bf16.msra.mxu0 0
    %438 = vmatprep.subr.bf16.mxu0 0
    %439 = vmatpush1.bf16.msra.mxu0 0
    %440 = vmatprep.subr.bf16.mxu0 0
    %441 = vmatpush1.bf16.msra.mxu0 0
    %442 = vmatprep.subr.bf16.mxu0 0
    %443 = vmatpush1.bf16.msra.mxu0 0
    %444 = vmatprep.subr.bf16.mxu0 0
    %445 = vmatpush1.bf16.msra.mxu0 0
    %446 = vmatprep.subr.bf16.mxu0 0
    %447 = vmatpush1.bf16.msra.mxu0 %v422
    %448 = vmatprep.subr.bf16.mxu0 0
    %449 = vmatpush2.bf16.msra.mxu0 0
    %450 = vmatprep.subr.bf16.mxu0 0
    %451 = vmatpush2.bf16.msra.mxu0 0
    %452 = vmatprep.subr.bf16.mxu0 0
    %453 = vmatpush2.bf16.msra.mxu0 0
    %454 = vmatprep.subr.bf16.mxu0 0
    %455 = vmatpush2.bf16.msra.mxu0 0
    %456 = vmatprep.subr.bf16.mxu0 0
    %457 = vmatpush2.bf16.msra.mxu0 0
    %458 = vmatprep.subr.bf16.mxu0 0
    %459 = vmatpush2.bf16.msra.mxu0 0
    %460 = vmatprep.subr.bf16.mxu0 0
    %461 = vmatpush2.bf16.msra.mxu0 0
    %462 = vmatprep.subr.bf16.mxu0 0
    %463 = vmatpush2.bf16.msra.mxu0 0
    %464 = vmatprep.mubr.bf16.mxu0 0
    %465 = vmatmul.mubr.bf16.gmra.mxu0 %v430
    %v466 = vpop.f32.mrf.mxu0
    %v467 = vadd.f32 0.0, %v466
    %v468 = vpop.f32.mrf.mxu0
    %v469 = vpop.f32.mrf.mxu0
    %v470 = vadd.f32 0.0, %v469
    %v471 = vpop.f32.mrf.mxu0
    %472 = vdwg.mxu0
    %v475 = vunpack.c.l.b16 %v371
    %v476 = vunpack.c.l.b16 %v372
    %v477 = vpack.c.b16 %v476, %v475
    %v479 = vsel %vm428, %v477, 0
    %481 = vmatprep.subr.bf16.mxu0 0
    %482 = vmatpush1.bf16.msra.mxu0 0
    %483 = vmatprep.subr.bf16.mxu0 0
    %484 = vmatpush1.bf16.msra.mxu0 0
    %485 = vmatprep.subr.bf16.mxu0 0
    %486 = vmatpush1.bf16.msra.mxu0 0
    %487 = vmatprep.subr.bf16.mxu0 0
    %488 = vmatpush1.bf16.msra.mxu0 0
    %489 = vmatprep.subr.bf16.mxu0 0
    %490 = vmatpush1.bf16.msra.mxu0 0
    %491 = vmatprep.subr.bf16.mxu0 0
    %492 = vmatpush1.bf16.msra.mxu0 0
    %493 = vmatprep.subr.bf16.mxu0 0
    %494 = vmatpush1.bf16.msra.mxu0 0
    %495 = vmatprep.subr.bf16.mxu0 0
    %496 = vmatpush1.bf16.msra.mxu0 %v370
    %497 = vmatprep.subr.bf16.mxu0 0
    %498 = vmatpush2.bf16.msra.mxu0 0
    %499 = vmatprep.subr.bf16.mxu0 0
    %500 = vmatpush2.bf16.msra.mxu0 0
    %501 = vmatprep.subr.bf16.mxu0 0
    %502 = vmatpush2.bf16.msra.mxu0 0
    %503 = vmatprep.subr.bf16.mxu0 0
    %504 = vmatpush2.bf16.msra.mxu0 0
    %505 = vmatprep.subr.bf16.mxu0 0
    %506 = vmatpush2.bf16.msra.mxu0 0
    %507 = vmatprep.subr.bf16.mxu0 0
    %508 = vmatpush2.bf16.msra.mxu0 0
    %509 = vmatprep.subr.bf16.mxu0 0
    %510 = vmatpush2.bf16.msra.mxu0 0
    %511 = vmatprep.subr.bf16.mxu0 0
    %512 = vmatpush2.bf16.msra.mxu0 0
    %513 = vmatprep.mubr.bf16.mxu0 0
    %514 = vmatmul.mubr.bf16.gmra.mxu0 %v479
    %v515 = vpop.f32.mrf.mxu0
    %v516 = vadd.f32 %v467, %v515
    %v517 = vpop.f32.mrf.mxu0
    %v518 = vpop.f32.mrf.mxu0
    %v519 = vadd.f32 %v470, %v518
    %v520 = vpop.f32.mrf.mxu0
    %521 = vdwg.mxu0
    %v523 = vsel %vm73, %v422, 0
    %525 = vmatprep.subr.bf16.mxu0 0
    %526 = vmatpush1.bf16.msra.mxu0 0
    %527 = vmatprep.subr.bf16.mxu0 0
    %528 = vmatpush1.bf16.msra.mxu0 0
    %529 = vmatprep.subr.bf16.mxu0 0
    %530 = vmatpush1.bf16.msra.mxu0 0
    %531 = vmatprep.subr.bf16.mxu0 0
    %532 = vmatpush1.bf16.msra.mxu0 0
    %533 = vmatprep.subr.bf16.mxu0 0
    %534 = vmatpush1.bf16.msra.mxu0 %v68
    %535 = vmatprep.subr.bf16.mxu0 0
    %536 = vmatpush1.bf16.msra.mxu0 %v67
    %537 = vmatprep.subr.bf16.mxu0 0
    %538 = vmatpush1.bf16.msra.mxu0 %v66
    %539 = vmatprep.subr.bf16.mxu0 0
    %540 = vmatpush1.bf16.msra.mxu0 %v65
    %541 = vmatprep.subr.bf16.mxu0 0
    %542 = vmatpush2.bf16.msra.mxu0 0
    %543 = vmatprep.subr.bf16.mxu0 0
    %544 = vmatpush2.bf16.msra.mxu0 0
    %545 = vmatprep.subr.bf16.mxu0 0
    %546 = vmatpush2.bf16.msra.mxu0 0
    %547 = vmatprep.subr.bf16.mxu0 0
    %548 = vmatpush2.bf16.msra.mxu0 0
    %549 = vmatprep.subr.bf16.mxu0 0
    %550 = vmatpush2.bf16.msra.mxu0 0
    %551 = vmatprep.subr.bf16.mxu0 0
    %552 = vmatpush2.bf16.msra.mxu0 0
    %553 = vmatprep.subr.bf16.mxu0 0
    %554 = vmatpush2.bf16.msra.mxu0 0
    %555 = vmatprep.subr.bf16.mxu0 0
    %556 = vmatpush2.bf16.msra.mxu0 0
    %557 = vmatprep.mubr.bf16.mxu0 0
    %558 = vmatmul.mubr.bf16.gmra.mxu0 %v523
    %v559 = vpop.f32.mrf.mxu0
    %v560 = vadd.f32 0.0, %v559
    %v561 = vpop.f32.mrf.mxu0
    %v562 = vpop.f32.mrf.mxu0
    %v563 = vadd.f32 0.0, %v562
    %v564 = vpop.f32.mrf.mxu0
    %565 = vdwg.mxu0
    %v566 = vsub.f32 %v560, %v368
    %v567 = vsub.f32 %v563, %v369
    %s568 = scalar_lea.vmem %s4, 16
    %v569 = vld [vmem:[%s568] sm:$0xf]
    %v570 = vld [vmem:[%s568 + $0x4] sm:$0xf]
    %v571 = vpack.c.bf16 %v567, %v566
    %v574 = vunpack.c.l.b16 %v569
    %v575 = vunpack.c.l.b16 %v570
    %v576 = vpack.c.b16 %v575, %v574
    %v578 = vsel %vm428, %v576, 0
    %580 = vmatprep.subr.bf16.mxu0 0
    %581 = vmatpush1.bf16.msra.mxu0 0
    %582 = vmatprep.subr.bf16.mxu0 0
    %583 = vmatpush1.bf16.msra.mxu0 0
    %584 = vmatprep.subr.bf16.mxu0 0
    %585 = vmatpush1.bf16.msra.mxu0 0
    %586 = vmatprep.subr.bf16.mxu0 0
    %587 = vmatpush1.bf16.msra.mxu0 0
    %588 = vmatprep.subr.bf16.mxu0 0
    %589 = vmatpush1.bf16.msra.mxu0 0
    %590 = vmatprep.subr.bf16.mxu0 0
    %591 = vmatpush1.bf16.msra.mxu0 0
    %592 = vmatprep.subr.bf16.mxu0 0
    %593 = vmatpush1.bf16.msra.mxu0 0
    %594 = vmatprep.subr.bf16.mxu0 0
    %595 = vmatpush1.bf16.msra.mxu0 %v571
    %596 = vmatprep.subr.bf16.mxu0 0
    %597 = vmatpush2.bf16.msra.mxu0 0
    %598 = vmatprep.subr.bf16.mxu0 0
    %599 = vmatpush2.bf16.msra.mxu0 0
    %600 = vmatprep.subr.bf16.mxu0 0
    %601 = vmatpush2.bf16.msra.mxu0 0
    %602 = vmatprep.subr.bf16.mxu0 0
    %603 = vmatpush2.bf16.msra.mxu0 0
    %604 = vmatprep.subr.bf16.mxu0 0
    %605 = vmatpush2.bf16.msra.mxu0 0
    %606 = vmatprep.subr.bf16.mxu0 0
    %607 = vmatpush2.bf16.msra.mxu0 0
    %608 = vmatprep.subr.bf16.mxu0 0
    %609 = vmatpush2.bf16.msra.mxu0 0
    %610 = vmatprep.subr.bf16.mxu0 0
    %611 = vmatpush2.bf16.msra.mxu0 0
    %612 = vmatprep.mubr.bf16.mxu0 0
    %613 = vmatmul.mubr.bf16.gmra.mxu0 %v578
    %v614 = vpop.f32.mrf.mxu0
    %v615 = vadd.f32 0.0, %v614
    %v616 = vpop.f32.mrf.mxu0
    %v617 = vpop.f32.mrf.mxu0
    %v618 = vadd.f32 0.0, %v617
    %v619 = vpop.f32.mrf.mxu0
    %620 = vdwg.mxu0
    %v621 = vadd.f32 %v516, %v615
    %v622 = vadd.f32 %v519, %v618
    %v623 = vld [vmem:[%s1] sm:$0xf]
    %v624 = vld [vmem:[%s5] sm:$0xf]
    %v625 = vld [vmem:[%s5 + $0x4] sm:$0xf]
    %v628 = vunpack.c.l.b16 %v624
    %v629 = vunpack.c.l.b16 %v625
    %v630 = vpack.c.b16 %v629, %v628
    %v632 = vsel %vm127, %v630, 0
    %v635 = vsel %vm131, %v623, 0
    %637 = vmatprep.subr.bf16.mxu0 0
    %638 = vmatpush1.bf16.msra.mxu0 0
    %639 = vmatprep.subr.bf16.mxu0 0
    %640 = vmatpush1.bf16.msra.mxu0 0
    %641 = vmatprep.subr.bf16.mxu0 0
    %642 = vmatpush1.bf16.msra.mxu0 0
    %643 = vmatprep.subr.bf16.mxu0 0
    %644 = vmatpush1.bf16.msra.mxu0 0
    %645 = vmatprep.subr.bf16.mxu0 0
    %646 = vmatpush1.bf16.msra.mxu0 0
    %647 = vmatprep.subr.bf16.mxu0 0
    %648 = vmatpush1.bf16.msra.mxu0 0
    %649 = vmatprep.subr.bf16.mxu0 0
    %650 = vmatpush1.bf16.msra.mxu0 0
    %651 = vmatprep.subr.bf16.mxu0 0
    %652 = vmatpush1.bf16.msra.mxu0 %v635
    %653 = vmatprep.subr.bf16.mxu0 0
    %654 = vmatpush2.bf16.msra.mxu0 0
    %655 = vmatprep.subr.bf16.mxu0 0
    %656 = vmatpush2.bf16.msra.mxu0 0
    %657 = vmatprep.subr.bf16.mxu0 0
    %658 = vmatpush2.bf16.msra.mxu0 0
    %659 = vmatprep.subr.bf16.mxu0 0
    %660 = vmatpush2.bf16.msra.mxu0 0
    %661 = vmatprep.subr.bf16.mxu0 0
    %662 = vmatpush2.bf16.msra.mxu0 0
    %663 = vmatprep.subr.bf16.mxu0 0
    %664 = vmatpush2.bf16.msra.mxu0 0
    %665 = vmatprep.subr.bf16.mxu0 0
    %666 = vmatpush2.bf16.msra.mxu0 0
    %667 = vmatprep.subr.bf16.mxu0 0
    %668 = vmatpush2.bf16.msra.mxu0 0
    %669 = vmatprep.mubr.bf16.mxu0 0
    %670 = vmatmul.mubr.bf16.gmra.mxu0 %v632
    %v671 = vpop.f32.mrf.mxu0
    %v672 = vadd.f32 0.0, %v671
    %v673 = vpop.f32.mrf.mxu0
    %v674 = vpop.f32.mrf.mxu0
    %v675 = vadd.f32 0.0, %v674
    %v676 = vpop.f32.mrf.mxu0
    %677 = vdwg.mxu0
    %v678 = vadd.f32 %v621, %v672
    %v679 = vadd.f32 %v622, %v675
    %v680 = vunpack.c.l.bf16 %v623
    %v681 = vsel %vm73, %v623, 0
    %683 = vmatprep.subr.bf16.mxu0 0
    %684 = vmatpush1.bf16.msra.mxu0 0
    %685 = vmatprep.subr.bf16.mxu0 0
    %686 = vmatpush1.bf16.msra.mxu0 0
    %687 = vmatprep.subr.bf16.mxu0 0
    %688 = vmatpush1.bf16.msra.mxu0 0
    %689 = vmatprep.subr.bf16.mxu0 0
    %690 = vmatpush1.bf16.msra.mxu0 0
    %691 = vmatprep.subr.bf16.mxu0 0
    %692 = vmatpush1.bf16.msra.mxu0 %v68
    %693 = vmatprep.subr.bf16.mxu0 0
    %694 = vmatpush1.bf16.msra.mxu0 %v67
    %695 = vmatprep.subr.bf16.mxu0 0
    %696 = vmatpush1.bf16.msra.mxu0 %v66
    %697 = vmatprep.subr.bf16.mxu0 0
    %698 = vmatpush1.bf16.msra.mxu0 %v65
    %699 = vmatprep.subr.bf16.mxu0 0
    %700 = vmatpush2.bf16.msra.mxu0 0
    %701 = vmatprep.subr.bf16.mxu0 0
    %702 = vmatpush2.bf16.msra.mxu0 0
    %703 = vmatprep.subr.bf16.mxu0 0
    %704 = vmatpush2.bf16.msra.mxu0 0
    %705 = vmatprep.subr.bf16.mxu0 0
    %706 = vmatpush2.bf16.msra.mxu0 0
    %707 = vmatprep.subr.bf16.mxu0 0
    %708 = vmatpush2.bf16.msra.mxu0 0
    %709 = vmatprep.subr.bf16.mxu0 0
    %710 = vmatpush2.bf16.msra.mxu0 0
    %711 = vmatprep.subr.bf16.mxu0 0
    %712 = vmatpush2.bf16.msra.mxu0 0
    %713 = vmatprep.subr.bf16.mxu0 0
    %714 = vmatpush2.bf16.msra.mxu0 0
    %715 = vmatprep.mubr.bf16.mxu0 0
    %716 = vmatmul.mubr.bf16.gmra.mxu0 %v681
    %v717 = vpop.f32.mrf.mxu0
    %v718 = vadd.f32 0.0, %v717
    %v719 = vpop.f32.mrf.mxu0
    %v720 = vpop.f32.mrf.mxu0
    %v721 = vpop.f32.mrf.mxu0
    %722 = vdwg.mxu0
    %v723 = vmul.f32 %v718, 0.5
    %s724 = scalar_lea.vmem %s5, 8
    %v725 = vld [vmem:[%s724] sm:$0xf]
    %v726 = vld [vmem:[%s724 + $0x4] sm:$0xf]
    %v727 = vpack.c.bf16 %v723, %v723
    %v730 = vunpack.c.l.b16 %v725
    %v731 = vunpack.c.l.b16 %v726
    %v732 = vpack.c.b16 %v731, %v730
    %v734 = vsel %vm127, %v732, 0
    %v737 = vsel %vm131, %v727, 0
    %739 = vmatprep.subr.bf16.mxu0 0
    %740 = vmatpush1.bf16.msra.mxu0 0
    %741 = vmatprep.subr.bf16.mxu0 0
    %742 = vmatpush1.bf16.msra.mxu0 0
    %743 = vmatprep.subr.bf16.mxu0 0
    %744 = vmatpush1.bf16.msra.mxu0 0
    %745 = vmatprep.subr.bf16.mxu0 0
    %746 = vmatpush1.bf16.msra.mxu0 0
    %747 = vmatprep.subr.bf16.mxu0 0
    %748 = vmatpush1.bf16.msra.mxu0 0
    %749 = vmatprep.subr.bf16.mxu0 0
    %750 = vmatpush1.bf16.msra.mxu0 0
    %751 = vmatprep.subr.bf16.mxu0 0
    %752 = vmatpush1.bf16.msra.mxu0 0
    %753 = vmatprep.subr.bf16.mxu0 0
    %754 = vmatpush1.bf16.msra.mxu0 %v737
    %755 = vmatprep.subr.bf16.mxu0 0
    %756 = vmatpush2.bf16.msra.mxu0 0
    %757 = vmatprep.subr.bf16.mxu0 0
    %758 = vmatpush2.bf16.msra.mxu0 0
    %759 = vmatprep.subr.bf16.mxu0 0
    %760 = vmatpush2.bf16.msra.mxu0 0
    %761 = vmatprep.subr.bf16.mxu0 0
    %762 = vmatpush2.bf16.msra.mxu0 0
    %763 = vmatprep.subr.bf16.mxu0 0
    %764 = vmatpush2.bf16.msra.mxu0 0
    %765 = vmatprep.subr.bf16.mxu0 0
    %766 = vmatpush2.bf16.msra.mxu0 0
    %767 = vmatprep.subr.bf16.mxu0 0
    %768 = vmatpush2.bf16.msra.mxu0 0
    %769 = vmatprep.subr.bf16.mxu0 0
    %770 = vmatpush2.bf16.msra.mxu0 0
    %771 = vmatprep.mubr.bf16.mxu0 0
    %772 = vmatmul.mubr.bf16.gmra.mxu0 %v734
    %v773 = vpop.f32.mrf.mxu0
    %v774 = vadd.f32 0.0, %v773
    %v775 = vpop.f32.mrf.mxu0
    %v776 = vpop.f32.mrf.mxu0
    %v777 = vadd.f32 0.0, %v776
    %v778 = vpop.f32.mrf.mxu0
    %779 = vdwg.mxu0
    %v780 = vadd.f32 %v678, %v774
    %v781 = vadd.f32 %v679, %v777
    %v782 = vsel %vm73, %v727, 0
    %784 = vmatprep.subr.bf16.mxu0 0
    %785 = vmatpush1.bf16.msra.mxu0 0
    %786 = vmatprep.subr.bf16.mxu0 0
    %787 = vmatpush1.bf16.msra.mxu0 0
    %788 = vmatprep.subr.bf16.mxu0 0
    %789 = vmatpush1.bf16.msra.mxu0 0
    %790 = vmatprep.subr.bf16.mxu0 0
    %791 = vmatpush1.bf16.msra.mxu0 0
    %792 = vmatprep.subr.bf16.mxu0 0
    %793 = vmatpush1.bf16.msra.mxu0 %v68
    %794 = vmatprep.subr.bf16.mxu0 0
    %795 = vmatpush1.bf16.msra.mxu0 %v67
    %796 = vmatprep.subr.bf16.mxu0 0
    %797 = vmatpush1.bf16.msra.mxu0 %v66
    %798 = vmatprep.subr.bf16.mxu0 0
    %799 = vmatpush1.bf16.msra.mxu0 %v65
    %800 = vmatprep.subr.bf16.mxu0 0
    %801 = vmatpush2.bf16.msra.mxu0 0
    %802 = vmatprep.subr.bf16.mxu0 0
    %803 = vmatpush2.bf16.msra.mxu0 0
    %804 = vmatprep.subr.bf16.mxu0 0
    %805 = vmatpush2.bf16.msra.mxu0 0
    %806 = vmatprep.subr.bf16.mxu0 0
    %807 = vmatpush2.bf16.msra.mxu0 0
    %808 = vmatprep.subr.bf16.mxu0 0
    %809 = vmatpush2.bf16.msra.mxu0 0
    %810 = vmatprep.subr.bf16.mxu0 0
    %811 = vmatpush2.bf16.msra.mxu0 0
    %812 = vmatprep.subr.bf16.mxu0 0
    %813 = vmatpush2.bf16.msra.mxu0 0
    %814 = vmatprep.subr.bf16.mxu0 0
    %815 = vmatpush2.bf16.msra.mxu0 0
    %816 = vmatprep.mubr.bf16.mxu0 0
    %817 = vmatmul.mubr.bf16.gmra.mxu0 %v782
    %v818 = vpop.f32.mrf.mxu0
    %v819 = vadd.f32 0.0, %v818
    %v820 = vpop.f32.mrf.mxu0
    %v821 = vpop.f32.mrf.mxu0
    %v822 = vpop.f32.mrf.mxu0
    %823 = vdwg.mxu0
    %v824 = vsub.f32 %v819, %v680
    %s825 = scalar_lea.vmem %s5, 16
    %v826 = vld [vmem:[%s825] sm:$0xf]
    %v827 = vld [vmem:[%s825 + $0x4] sm:$0xf]
    %v828 = vpack.c.bf16 %v824, %v824
    %v831 = vunpack.c.l.b16 %v826
    %v832 = vunpack.c.l.b16 %v827
    %v833 = vpack.c.b16 %v832, %v831
    %v835 = vsel %vm127, %v833, 0
    %v838 = vsel %vm131, %v828, 0
    %840 = vmatprep.subr.bf16.mxu0 0
    %841 = vmatpush1.bf16.msra.mxu0 0
    %842 = vmatprep.subr.bf16.mxu0 0
    %843 = vmatpush1.bf16.msra.mxu0 0
    %844 = vmatprep.subr.bf16.mxu0 0
    %845 = vmatpush1.bf16.msra.mxu0 0
    %846 = vmatprep.subr.bf16.mxu0 0
    %847 = vmatpush1.bf16.msra.mxu0 0
    %848 = vmatprep.subr.bf16.mxu0 0
    %849 = vmatpush1.bf16.msra.mxu0 0
    %850 = vmatprep.subr.bf16.mxu0 0
    %851 = vmatpush1.bf16.msra.mxu0 0
    %852 = vmatprep.subr.bf16.mxu0 0
    %853 = vmatpush1.bf16.msra.mxu0 0
    %854 = vmatprep.subr.bf16.mxu0 0
    %855 = vmatpush1.bf16.msra.mxu0 %v838
    %856 = vmatprep.subr.bf16.mxu0 0
    %857 = vmatpush2.bf16.msra.mxu0 0
    %858 = vmatprep.subr.bf16.mxu0 0
    %859 = vmatpush2.bf16.msra.mxu0 0
    %860 = vmatprep.subr.bf16.mxu0 0
    %861 = vmatpush2.bf16.msra.mxu0 0
    %862 = vmatprep.subr.bf16.mxu0 0
    %863 = vmatpush2.bf16.msra.mxu0 0
    %864 = vmatprep.subr.bf16.mxu0 0
    %865 = vmatpush2.bf16.msra.mxu0 0
    %866 = vmatprep.subr.bf16.mxu0 0
    %867 = vmatpush2.bf16.msra.mxu0 0
    %868 = vmatprep.subr.bf16.mxu0 0
    %869 = vmatpush2.bf16.msra.mxu0 0
    %870 = vmatprep.subr.bf16.mxu0 0
    %871 = vmatpush2.bf16.msra.mxu0 0
    %872 = vmatprep.mubr.bf16.mxu0 0
    %873 = vmatmul.mubr.bf16.gmra.mxu0 %v835
    %v874 = vpop.f32.mrf.mxu0
    %v875 = vadd.f32 0.0, %v874
    %v876 = vpop.f32.mrf.mxu0
    %v877 = vpop.f32.mrf.mxu0
    %v878 = vadd.f32 0.0, %v877
    %v879 = vpop.f32.mrf.mxu0
    %880 = vdwg.mxu0
    %v881 = vadd.f32 %v780, %v875
    %v882 = vadd.f32 %v781, %v878
    %v883 = vsel %vm73, %v881, 0.0
    %884 = vadd.xlane.f32.xlu0 %v883
    %v885 = vpop.xlane.xlu0 %884
    %v886 = vsel %vm73, %v882, 0.0
    %887 = vadd.xlane.f32.xlu0 %v886
    %v888 = vpop.xlane.xlu0 %887
    %v889 = vadd.f32 %v885, %v888
    %v890 = vmul.f32 %v889, %v335
    %v891 = vsub.f32 %v881, %v890
    %v892 = vsub.f32 %v882, %v890
    %v893 = vmul.f32 %v891, %v891
    %v894 = vmul.f32 %v892, %v892
    %v895 = vsel %vm73, %v893, 0.0
    %896 = vadd.xlane.f32.xlu0 %v895
    %v897 = vpop.xlane.xlu0 %896
    %v898 = vsel %vm73, %v894, 0.0
    %899 = vadd.xlane.f32.xlu0 %v898
    %v900 = vpop.xlane.xlu0 %899
    %v901 = vadd.f32 %v897, %v900
    %v902 = vmul.f32 %v901, %v335
    %v903 = vld [vmem:[%s8] sm:$0xff]
    %v904 = vadd.f32 %v902, 1e-05
    %v905 = vrsqrt.pop %v904
    %v906 = vmul.f32 %v903, %v905
    %908 = vset.pattern.permute.xlu0 0
    %909 = vperm.xlu0 %908, %v906
    %v910 = vpop.permute.xlu0 %909
    %v912 = vmul.f32 %v891, %v910
    %v913 = vmul.f32 %v892, %v910
    %v914 = vld [vmem:[%s9] sm:$0xff]
    %916 = vset.pattern.permute.xlu0 0
    %917 = vperm.xlu0 %916, %v914
    %v918 = vpop.permute.xlu0 %917
    %v920 = vadd.f32 %v912, %v918
    %v921 = vadd.f32 %v913, %v918
    %v922 = vmax.f32 %v920, 0.0
    %v923 = vmax.f32 %v921, 0.0
    %924 = vst.msk [vmem:[#allocation2] sm:$0xff] %vm73, %v922
    %925 = vst.msk [vmem:[#allocation2 + $0x8] sm:$0xff] %vm73, %v923
    // Predicated region
    $region42: #{spherical_cheb_bn_pool_concat.1} parent=1 // pred_check
      _
    $region43: #{spherical_cheb_bn_pool_concat.1} parent=1 // pred_check_branch
      %927 = sbr.rel (0) target = $region45
    $region44: #{spherical_cheb_bn_pool_concat.1} parent=1 // pred_region
      %s929 = ssub.s32 256, 256
      %930 = vsyncadd [#allocation3], %s929
      %s931 = sshll.u32 [#allocation2], 4
      %s932 = int_to_ptr.vmem [resolvable:$true] %s931
      %937 = dma.vmem_to_hbm [thread:$0]  %s932, 256, %s10, [#allocation3], 128, 128, 8
    $region45: #{spherical_cheb_bn_pool_concat.1} parent=1 // pred_fallthru
      _
    // Predicated region
    $region46: #{spherical_cheb_bn_pool_concat.1} parent=1 // pred_check
      _
    $region47: #{spherical_cheb_bn_pool_concat.1} parent=1 // pred_check_branch
      %939 = sbr.rel (0) target = $region49
    $region48: #{spherical_cheb_bn_pool_concat.1} parent=1 // pred_region
      %940 = dma.done [#allocation3], 256
    $region49: #{spherical_cheb_bn_pool_concat.1} parent=1 // pred_fallthru
      _
    %941 = vsyncpa [#allocation3], 1

</llo_original>
